<compile_context>
chip_gen: v6e
topology: v6e:2x2x1
jax: 0.10.0
libtpu: 0.0.40
codegen_flags: <defaults>
</compile_context>

<pallas_src>
import math
import functools

import jax
import jax.numpy as jnp
from jax.experimental import pallas as pl
from jax.experimental.pallas import tpu as pltpu


def _build_pe_table(max_seq_len: int, d_model: int) -> jnp.ndarray:
    """Positional-encoding buffer matching the PyTorch loop in the module exactly.

    For column c the exponent is 2*c/d_model (for BOTH even and odd columns), sin on even
    columns / cos on odd columns -- this intentionally reproduces the module, which differs
    from the canonical Vaswani formula.
    """
    assert d_model % 2 == 0, "d_model must be even (as the PyTorch loop assumes)"
    pos = jnp.arange(max_seq_len, dtype=jnp.float32)[:, None]   # (S, 1)
    col = jnp.arange(d_model, dtype=jnp.float32)[None, :]       # (1, D)
    denom = jnp.power(10000.0, 2.0 * col / float(d_model))      # (1, D)
    angle = pos / denom                                          # (S, D)
    even_mask = (jnp.arange(d_model) % 2 == 0)[None, :]
    pe = jnp.where(even_mask, jnp.sin(angle), jnp.cos(angle))
    return pe.astype(jnp.float32)                                # (S, D)


def _vmem_capacity_bytes() -> int:
    """Physical per-core VMEM; conservative v7x fallback if the query is unavailable."""
    try:
        cap = getattr(pltpu.get_tpu_info(), "vmem_capacity_bytes", None)
        if cap:
            return int(cap)
    except Exception:
        pass
    return 64 * 1024 * 1024


def _choose_tile_s(S: int, row_bytes: int, target_bytes: int, *, min_steps: int = 2) -> int:
    """Sequence-tile rows: ~target_bytes per x tile, multiple of 8 (or full S), and capped
    so the grid has >= min_steps steps when S allows it (v7x has 2 TensorCores)."""
    ts = max(1, target_bytes // max(1, row_bytes))
    if min_steps > 1 and S >= 8 * min_steps:
        cap = ((-(-S // min_steps)) + 7) // 8 * 8
        ts = min(ts, cap)
    if ts >= S:
        return S
    return max(8, (ts // 8) * 8)


def _pos_enc_kernel_folded(x_ref, pe_ref, o_ref, *, scale: float, nb: int, D: int):
    # x_ref / o_ref : (ts, nb*D) in VMEM ; pe_ref : (ts, D) float32 in VMEM.
    # Replicate pe across the nb batch elements with static, 128-lane-aligned slices
    # (D % 128 == 0 on this path) -- pure aligned vreg loads/stores, no HBM pe tiling.
    pe = pe_ref[...]                                        # (ts, D) f32, hoisted
    for b in range(nb):                                     # static unroll (nb is small)
        sl = slice(b * D, (b + 1) * D)
        xb = x_ref[:, sl].astype(jnp.float32)
        o_ref[:, sl] = (xb * scale + pe).astype(o_ref.dtype)


def _pos_enc_kernel_3d(x_ref, pe_ref, o_ref, *, scale: float):
    # x_ref / o_ref : (ts, B, D) ; pe_ref : (ts, 1, D) float32 -> size-1 sublane broadcast.
    x = x_ref[...].astype(jnp.float32)
    o_ref[...] = (x * scale + pe_ref[...]).astype(o_ref.dtype)


def positional_encoder(x: jnp.ndarray, pe_table: jnp.ndarray, d_model: int,
                       *, target_tile_bytes: int = 8 * 1024 * 1024,
                       donate_x: bool = False) -> jnp.ndarray:
    """x: (seq_len, batch, d_model). Returns x * sqrt(d_model) + pe, same shape/dtype."""
    S, B, D = x.shape
    assert D == d_model, "last dim of x must equal d_model"
    assert S <= pe_table.shape[0], "seq_len exceeds max_seq_len of the PE table"

    pe = pe_table[:S].astype(jnp.float32)            # (S, D); keep f32 (tiny traffic)
    scale = float(math.sqrt(d_model))
    itemsize = jnp.dtype(x.dtype).itemsize

    vmem_cap = _vmem_capacity_bytes()
    # Working set ~= 2x double-buffered input tile + 2x output tile + pe + slack (~5 tiles).
    per_tile_budget = max(512 * 1024, int(0.55 * vmem_cap) // 5)
    tile_target = min(int(target_tile_bytes), per_tile_budget)

    folded = (D % 128 == 0)
    if folded:
        # Lane-dense main path: fold (B, D) -> B*D; tile batch in groups of nb so even
        # huge-batch rows respect the tile budget.
        nb = max(1, min(B, tile_target // max(1, 8 * D * itemsize)))
        row_bytes = nb * D * itemsize
        ts = _choose_tile_s(S, row_bytes, tile_target)
        x_in = x.reshape(S, B * D)                   # contiguous view, no copy
        grid = (pl.cdiv(S, ts), pl.cdiv(B, nb))
        in_specs = [
            pl.BlockSpec((ts, nb * D), lambda i, j: (i, j)),
            pl.BlockSpec((ts, D), lambda i, j: (i, 0)),
        ]
        out_specs = pl.BlockSpec((ts, nb * D), lambda i, j: (i, j))
        out_shape = jax.ShapeDtypeStruct((S, B * D), x.dtype)
        kernel = functools.partial(_pos_enc_kernel_folded, scale=scale, nb=nb, D=D)
        dims = ("parallel", "parallel")
        pe_in = pe
        tile_bytes = ts * row_bytes
        pe_tile_bytes = ts * D * 4
    else:
        # Small / ragged d_model (demo shapes): simple 3-D blocks, in-kernel pe broadcast.
        row_bytes = B * D * itemsize
        ts = _choose_tile_s(S, row_bytes, tile_target)
        x_in = x
        grid = (pl.cdiv(S, ts),)
        in_specs = [
            pl.BlockSpec((ts, B, D), lambda i: (i, 0, 0)),
            pl.BlockSpec((ts, 1, D), lambda i: (i, 0, 0)),
        ]
        out_specs = pl.BlockSpec((ts, B, D), lambda i: (i, 0, 0))
        out_shape = jax.ShapeDtypeStruct((S, B, D), x.dtype)
        kernel = functools.partial(_pos_enc_kernel_3d, scale=scale)
        dims = ("parallel",)
        pe_in = pe[:, None, :]                       # (S, 1, D)
        tile_bytes = ts * row_bytes
        pe_tile_bytes = ts * D * 4

    working_set = 4 * tile_bytes + 2 * pe_tile_bytes + (4 << 20)
    vmem_limit = int(min(0.75 * vmem_cap, max(working_set, 32 << 20)))

    cost = pl.CostEstimate(
        flops=2 * S * B * D,
        transcendentals=0,
        bytes_accessed=2 * S * B * D * itemsize + S * D * 4,
    )

    out = pl.pallas_call(
        kernel,
        out_shape=out_shape,
        grid_spec=pltpu.PrefetchScalarGridSpec(
            num_scalar_prefetch=0,
            grid=grid,
            in_specs=in_specs,
            out_specs=out_specs,
        ),
        compiler_params=pltpu.CompilerParams(
            dimension_semantics=dims,                # independent tiles -> 2-TC on v7x
            vmem_limit_bytes=vmem_limit,
        ),
        cost_estimate=cost,
        input_output_aliases={0: 0} if donate_x else {},
    )(x_in, pe_in)

    if folded:
        out = out.reshape(S, B, D)
    return out


if __name__ == "__main__":
    key = jax.random.PRNGKey(0)
    k1, k2 = jax.random.split(key)

    # Case 1: module's toy config (d_model=32 < 128 -> 3-D broadcast path).
    d_model, max_seq_len, seq_len, batch = 32, 16, 8, 2
    x = jax.random.normal(k1, (seq_len, batch, d_model), dtype=jnp.float32)
    pe_table = _build_pe_table(max_seq_len, d_model)
    out = jax.block_until_ready(positional_encoder(x, pe_table, d_model))
    ref = x * math.sqrt(d_model) + pe_table[:seq_len][:, None, :]
    assert out.shape == (seq_len, batch, d_model)
    assert jnp.allclose(out, ref, atol=1e-5, rtol=1e-5), "mismatch vs reference (3D path)"

    # Case 2: d_model multiple of 128 -> dense lane-folded path, multi-step parallel grid,
    # aliased (donated) input.  donate_x only pays off under jit when x is dead; here it
    # just exercises the code path.
    d_model2, max_seq_len2, seq_len2, batch2 = 128, 32, 16, 2
    x2 = jax.random.normal(k2, (seq_len2, batch2, d_model2), dtype=jnp.float32)
    pe_table2 = _build_pe_table(max_seq_len2, d_model2)
    ref2 = x2 * math.sqrt(d_model2) + pe_table2[:seq_len2][:, None, :]
    out2 = jax.block_until_ready(
        positional_encoder(x2, pe_table2, d_model2, donate_x=True))
    assert out2.shape == (seq_len2, batch2, d_model2)
    assert jnp.allclose(out2, ref2, atol=1e-5, rtol=1e-5), "mismatch vs reference (folded path)"

    print("KERNEL_OK")
</pallas_src>

<mosaic_0001>
module attributes {stable_mosaic.version = 11 : i64} {
  func.func @_pos_enc_kernel_3d(%arg0: i32, %arg1: memref<8x2x32xf32, #tpu.memory_space<vmem>>, %arg2: memref<8x1x32xf32, #tpu.memory_space<vmem>>, %arg3: memref<8x2x32xf32, #tpu.memory_space<vmem>>) attributes {dimension_semantics = [#tpu.dimension_semantics<parallel>], iteration_bounds = array<i64: 1>, scalar_prefetch = 0 : i64, scratch_operands = 0 : i64, tpu.core_type = #tpu.core_type<tc>, window_params = [{transform_indices = @transform_0, window_bounds = array<i64: 8, 2, 32>}, {transform_indices = @transform_1, window_bounds = array<i64: 8, 1, 32>}, {transform_indices = @transform_2, window_bounds = array<i64: 8, 2, 32>}]} {
    %c0 = arith.constant 0 : index
    %c0_0 = arith.constant 0 : index
    %c0_1 = arith.constant 0 : index
    %0 = vector.load %arg1[%c0, %c0_0, %c0_1] : memref<8x2x32xf32, #tpu.memory_space<vmem>>, vector<8x2x32xf32>
    %cst = arith.constant 5.65685415 : f32
    %1 = vector.broadcast %cst : f32 to vector<8x2x32xf32>
    %2 = arith.mulf %0, %1 : vector<8x2x32xf32>
    %c0_2 = arith.constant 0 : index
    %c0_3 = arith.constant 0 : index
    %c0_4 = arith.constant 0 : index
    %3 = vector.load %arg2[%c0_2, %c0_3, %c0_4] : memref<8x1x32xf32, #tpu.memory_space<vmem>>, vector<8x1x32xf32>
    %4 = vector.broadcast %3 : vector<8x1x32xf32> to vector<8x2x32xf32>
    %5 = arith.addf %2, %4 : vector<8x2x32xf32>
    %c0_5 = arith.constant 0 : index
    %c0_6 = arith.constant 0 : index
    %c0_7 = arith.constant 0 : index
    %6 = vector.load %arg3[%c0_5, %c0_6, %c0_7] : memref<8x2x32xf32, #tpu.memory_space<vmem>>, vector<8x2x32xf32>
    tpu.vector_store %arg3[%c0_5, %c0_6, %c0_7], %5 {strides = array<i32>} : memref<8x2x32xf32, #tpu.memory_space<vmem>>, vector<8x2x32xf32>,
    return
  }
  func.func @transform_0(%arg0: i32) -> (i32, i32, i32) {
    %c0_i32 = arith.constant 0 : i32
    %c0_i32_0 = arith.constant 0 : i32
    %c0_i32_1 = arith.constant 0 : i32
    return %arg0, %c0_i32, %c0_i32_0 : i32, i32, i32
  }
  func.func @transform_1(%arg0: i32) -> (i32, i32, i32) {
    %c0_i32 = arith.constant 0 : i32
    %c0_i32_0 = arith.constant 0 : i32
    %c0_i32_1 = arith.constant 0 : i32
    return %arg0, %c0_i32, %c0_i32_0 : i32, i32, i32
  }
  func.func @transform_2(%arg0: i32) -> (i32, i32, i32) {
    %c0_i32 = arith.constant 0 : i32
    %c0_i32_0 = arith.constant 0 : i32
    %c0_i32_1 = arith.constant 0 : i32
    return %arg0, %c0_i32, %c0_i32_0 : i32, i32, i32
  }
}

</mosaic_0001>

<llo_original>
// kernel: tpu_custom_call.1
$region0: #{tpu_custom_call.1}
  #allocation0 [shape = 'u32[]', space=smem, size = 0x4, offset = 0x4, fixed_abs, tag = 'smem constant byte address 0x4 - core index']
  #allocation1 [shape = 'u32[144,128]{1,0:T(1,128)}', space=vmem, size = 0x12000, scoped, tag = 'internal scratch']
  %s0 = inlined_call_operand.hbm [shape: f32[8,2,32], index: 0, kind: input, shape index: {}]
  %s1 = inlined_call_operand.hbm [shape: f32[8,1,32], index: 1, kind: input, shape index: {}]
  %s2 = inlined_call_operand.hbm [shape: f32[8,2,32], index: 2, kind: output, shape index: {}]
  %s3 = sld [smem:[#allocation0]]
  $region26: #{tpu_custom_call.1} parent=0
    _
  %s5 = ssub.s32 1, %s3
  %s6 = scalar_select 0, %s5, %s3
  $region1: #{tpu_custom_call.1} parent=0
    #allocation2 [shape = 'u8[8192]{0}', space=vmem, size = 0x2000, scoped, tag = 'input window, operand 0, single buffered']
    #allocation3 [shape = 's32[1]{0}', space=sflag, size = 0x4, scoped, tag = 'scoped memory for tpu_custom_call.1']
    #allocation4 [shape = 's32[1]{0}', space=sflag, size = 0x4, scoped, tag = 'scoped memory for tpu_custom_call.1']
    #allocation5 [shape = 'u8[4096]{0}', space=vmem, size = 0x1000, scoped, tag = 'input window, operand 1, single buffered']
    #allocation6 [shape = 's32[1]{0}', space=sflag, size = 0x4, scoped, tag = 'scoped memory for tpu_custom_call.1']
    #allocation7 [shape = 'u8[8192]{0}', space=vmem, size = 0x2000, scoped, tag = 'output window, operand 0, single buffered']
    %7 = vsyncpa [#allocation3], 0
    %8 = vsyncpa [#allocation6], 0
    %9 = vsyncpa [#allocation4], 0
    // Predicated region
    $region2: #{tpu_custom_call.1} parent=1 // pred_check
      _
    $region3: #{tpu_custom_call.1} parent=1 // pred_check_branch
      %11 = sbr.rel (0) target = $region5
    $region4: #{tpu_custom_call.1} parent=1 // pred_region
      %s13 = ssub.s32 256, 256
      %14 = vsyncadd [#allocation3], %s13
      %s15 = sshll.u32 [#allocation2], 4
      %s16 = int_to_ptr.vmem [resolvable:$true] %s15
      %21 = dma.hbm_to_vmem [thread:$0]  %s0, 256, %s16, [#allocation3], 32, 32, 2
    $region5: #{tpu_custom_call.1} parent=1 // pred_fallthru
      _
    // Predicated region
    $region6: #{tpu_custom_call.1} parent=1 // pred_check
      _
    $region7: #{tpu_custom_call.1} parent=1 // pred_check_branch
      %23 = sbr.rel (0) target = $region9
    $region8: #{tpu_custom_call.1} parent=1 // pred_region
      %s25 = ssub.s32 128, 128
      %26 = vsyncadd [#allocation6], %s25
      %s27 = sshll.u32 [#allocation5], 4
      %s28 = int_to_ptr.vmem [resolvable:$true] %s27
      %33 = dma.hbm_to_vmem [thread:$0]  %s1, 128, %s28, [#allocation6], 16, 16, 1
    $region9: #{tpu_custom_call.1} parent=1 // pred_fallthru
      _
    // Predicated region
    $region10: #{tpu_custom_call.1} parent=1 // pred_check
      _
    $region11: #{tpu_custom_call.1} parent=1 // pred_check_branch
      %35 = sbr.rel (0) target = $region13
    $region12: #{tpu_custom_call.1} parent=1 // pred_region
      %36 = dma.done [#allocation3], 256
    $region13: #{tpu_custom_call.1} parent=1 // pred_fallthru
      _
    // Predicated region
    $region14: #{tpu_custom_call.1} parent=1 // pred_check
      _
    $region15: #{tpu_custom_call.1} parent=1 // pred_check_branch
      %38 = sbr.rel (0) target = $region17
    $region16: #{tpu_custom_call.1} parent=1 // pred_region
      %39 = dma.done [#allocation6], 128
    $region17: #{tpu_custom_call.1} parent=1 // pred_fallthru
      _
    %v40 = vld [vmem:[#allocation2] sm:$0x3]
    %v41 = vld [vmem:[#allocation2 + $0x2] sm:$0x3]
    %v42 = vld [vmem:[#allocation2 + $0x4] sm:$0x3]
    %v43 = vld [vmem:[#allocation2 + $0x6] sm:$0x3]
    %v44 = vld [vmem:[#allocation2 + $0x8] sm:$0x3]
    %v45 = vld [vmem:[#allocation2 + $0xa] sm:$0x3]
    %v46 = vld [vmem:[#allocation2 + $0xc] sm:$0x3]
    %v47 = vld [vmem:[#allocation2 + $0xe] sm:$0x3]
    %v48 = vmul.f32 %v40, 5.656854
    %v49 = vmul.f32 %v41, 5.656854
    %v50 = vmul.f32 %v42, 5.656854
    %v51 = vmul.f32 %v43, 5.656854
    %v52 = vmul.f32 %v44, 5.656854
    %v53 = vmul.f32 %v45, 5.656854
    %v54 = vmul.f32 %v46, 5.656854
    %v55 = vmul.f32 %v47, 5.656854
    %v56 = vld [vmem:[#allocation5] sm:$0x1]
    %v57 = vld [vmem:[#allocation5 + $0x1] sm:$0x1]
    %v58 = vld [vmem:[#allocation5 + $0x2] sm:$0x1]
    %v59 = vld [vmem:[#allocation5 + $0x3] sm:$0x1]
    %v60 = vld [vmem:[#allocation5 + $0x4] sm:$0x1]
    %v61 = vld [vmem:[#allocation5 + $0x5] sm:$0x1]
    %v62 = vld [vmem:[#allocation5 + $0x6] sm:$0x1]
    %v63 = vld [vmem:[#allocation5 + $0x7] sm:$0x1]
    %v72 = vlaneseq
    %v73 = vshrl.u32 %v72, 7
    %v74 = vsub.s32 0, %v73
    %v75 = vrot.slane %v56, %v74
    %v76 = vlaneseq
    %v77 = vshrl.u32 %v76, 7
    %v78 = vsub.s32 0, %v77
    %v79 = vrot.slane %v57, %v78
    %v80 = vlaneseq
    %v81 = vshrl.u32 %v80, 7
    %v82 = vsub.s32 0, %v81
    %v83 = vrot.slane %v58, %v82
    %v84 = vlaneseq
    %v85 = vshrl.u32 %v84, 7
    %v86 = vsub.s32 0, %v85
    %v87 = vrot.slane %v59, %v86
    %v88 = vlaneseq
    %v89 = vshrl.u32 %v88, 7
    %v90 = vsub.s32 0, %v89
    %v91 = vrot.slane %v60, %v90
    %v92 = vlaneseq
    %v93 = vshrl.u32 %v92, 7
    %v94 = vsub.s32 0, %v93
    %v95 = vrot.slane %v61, %v94
    %v96 = vlaneseq
    %v97 = vshrl.u32 %v96, 7
    %v98 = vsub.s32 0, %v97
    %v99 = vrot.slane %v62, %v98
    %v100 = vlaneseq
    %v101 = vshrl.u32 %v100, 7
    %v102 = vsub.s32 0, %v101
    %v103 = vrot.slane %v63, %v102
    %v112 = vadd.f32 %v48, %v75
    %v113 = vadd.f32 %v49, %v79
    %v114 = vadd.f32 %v50, %v83
    %v115 = vadd.f32 %v51, %v87
    %v116 = vadd.f32 %v52, %v91
    %v117 = vadd.f32 %v53, %v95
    %v118 = vadd.f32 %v54, %v99
    %v119 = vadd.f32 %v55, %v103
    %vm120 = vcmask 254976
    %121 = vst.msk [vmem:[#allocation7] sm:$0x3] %vm120, %v112
    %122 = vst.msk [vmem:[#allocation7 + $0x2] sm:$0x3] %vm120, %v113
    %123 = vst.msk [vmem:[#allocation7 + $0x4] sm:$0x3] %vm120, %v114
    %124 = vst.msk [vmem:[#allocation7 + $0x6] sm:$0x3] %vm120, %v115
    %125 = vst.msk [vmem:[#allocation7 + $0x8] sm:$0x3] %vm120, %v116
    %126 = vst.msk [vmem:[#allocation7 + $0xa] sm:$0x3] %vm120, %v117
    %127 = vst.msk [vmem:[#allocation7 + $0xc] sm:$0x3] %vm120, %v118
    %128 = vst.msk [vmem:[#allocation7 + $0xe] sm:$0x3] %vm120, %v119
    // Predicated region
    $region18: #{tpu_custom_call.1} parent=1 // pred_check
      _
    $region19: #{tpu_custom_call.1} parent=1 // pred_check_branch
      %130 = sbr.rel (0) target = $region21
    $region20: #{tpu_custom_call.1} parent=1 // pred_region
      %s132 = ssub.s32 256, 256
      %133 = vsyncadd [#allocation4], %s132
      %s134 = sshll.u32 [#allocation7], 4
      %s135 = int_to_ptr.vmem [resolvable:$true] %s134
      %140 = dma.vmem_to_hbm [thread:$0]  %s135, 256, %s2, [#allocation4], 32, 32, 2
    $region21: #{tpu_custom_call.1} parent=1 // pred_fallthru
      _
    // Predicated region
    $region22: #{tpu_custom_call.1} parent=1 // pred_check
      _
    $region23: #{tpu_custom_call.1} parent=1 // pred_check_branch
      %142 = sbr.rel (0) target = $region25
    $region24: #{tpu_custom_call.1} parent=1 // pred_region
      %143 = dma.done [#allocation4], 256
    $region25: #{tpu_custom_call.1} parent=1 // pred_fallthru
      _
    %144 = vsyncpa [#allocation3], 1
    %145 = vsyncpa [#allocation6], 1
    %146 = vsyncpa [#allocation4], 1

</llo_original>
